<compile_context>
chip_gen: v5e
topology: v5e:2x2
jax: 0.10.0
libtpu: 0.0.40
codegen_flags: <defaults>
</compile_context>

<pallas_src>
import functools

import jax
import jax.numpy as jnp
import numpy as np
from jax.experimental import pallas as pl
from jax.experimental.pallas import tpu as pltpu

AVAILABLE_OPS = ('max_pool_3x3', 'avg_pool_3x3', 'conv_3x3',
                 'sep_conv_3x3', 'identity', 'none')
BN_EPS = 1e-5


def _mixed_op_kernel(alphas_ref, xs_ref, m_ref, out_ref, *, channels):
    """One MixedOperation edge per grid step.

    alphas_ref: (E, 6) f32 SMEM — raw mixture weights (module applies no softmax).
    xs_ref:     (3, B, H+2, W*C) f32 VMEM.  Axis 0 is the W-shift (dj) tap:
                xs[0][.., w, :] = x[.., w-1, :] (zero at w==0), xs[1] = x,
                xs[2][.., w, :] = x[.., w+1, :] (zero at w==W-1); all zero-padded in H.
    m_ref:      (3*W*C, 2*W*C) bf16 VMEM banded conv weights
                ([conv_3x3 | fused sep_conv_3x3] stacked along N).
    out_ref:    (B, H, W*C) f32.
    """
    C = channels
    _, B, Hp2, WC = xs_ref.shape
    H = Hp2 - 2
    W = WC // C
    BH = B * H
    e = pl.program_id(0)

    xl = xs_ref[0]                                   # (B, H+2, WC)
    xc = xs_ref[1]
    xr = xs_ref[2]

    # --- avg_pool_3x3 (count_include_pad=True -> /9), separable sum ------------
    colsum = xl + xc + xr                            # zero fill handles all padding
    av = (colsum[:, 0:H] + colsum[:, 1:H + 1] + colsum[:, 2:H + 2]) * (1.0 / 9.0)

    # --- max_pool_3x3 (-inf padding), separable max; masks applied once --------
    neg = jnp.float32(-jnp.inf)
    lane = jax.lax.broadcasted_iota(jnp.int32, (1, 1, WC), 2)
    colmax = jnp.maximum(xc, jnp.maximum(jnp.where(lane >= C, xl, neg),
                                         jnp.where(lane < WC - C, xr, neg)))
    hrow = jax.lax.broadcasted_iota(jnp.int32, (1, Hp2, 1), 1)
    colmax = jnp.where(jnp.logical_and(hrow >= 1, hrow <= H), colmax, neg)
    mx = jnp.maximum(colmax[:, 0:H],
                     jnp.maximum(colmax[:, 1:H + 1], colmax[:, 2:H + 2]))

    # --- conv_3x3 and fused separable conv: a single K = 3*WC MXU matmul -------
    lhs = jnp.concatenate([xc[:, 0:H], xc[:, 1:H + 1], xc[:, 2:H + 2]],
                          axis=2).reshape(BH, 3 * WC)
    acc = jnp.dot(lhs.astype(jnp.bfloat16), m_ref[...],
                  preferred_element_type=jnp.float32)        # (BH, 2*WC) f32

    # --- BatchNorm2d (training batch stats, biased var) + ReLU -----------------
    s1 = jnp.sum(acc, axis=0, keepdims=True)                 # (1, 2*WC) one pass
    s2 = jnp.sum(acc * acc, axis=0, keepdims=True)

    def channel_total(v):        # (1, WC): every lane ends with its channel's total
        shift = WC // 2
        while shift >= C:        # direction-agnostic XLU roll tree (W power of two)
            v = v + pltpu.roll(v, shift=shift, axis=1)
            shift //= 2
        return v

    n_inv = 1.0 / float(BH * W)

    def bn_relu(pre, s1h, s2h):                              # pre: (BH, WC)
        mean = channel_total(s1h) * n_inv
        var = channel_total(s2h) * n_inv - mean * mean       # biased batch variance
        return jnp.maximum((pre - mean) * jax.lax.rsqrt(var + BN_EPS), 0.0)

    conv_out = bn_relu(acc[:, :WC], s1[:, :WC], s2[:, :WC]).reshape(B, H, WC)
    sep_out = bn_relu(acc[:, WC:], s1[:, WC:], s2[:, WC:]).reshape(B, H, WC)

    # --- weighted mixture ('none' contributes alphas[5] * 0 -> omitted) --------
    x_id = xc[:, 1:H + 1]
    out_ref[...] = (alphas_ref[e, 0] * mx + alphas_ref[e, 1] * av
                    + alphas_ref[e, 2] * conv_out + alphas_ref[e, 3] * sep_out
                    + alphas_ref[e, 4] * x_id)


def _banded_weights(kconv, kdw, kpw, width):
    """Fold conv_3x3 and (depthwise -> pointwise) sep_conv_3x3 into a banded block
    matrix acting on lane-folded rows.  Returns (E, 3*W*C, 2*W*C) with
      M[e, di*WC + w_in*C + ci, w_out*C + co]      = Kconv[e, di, dj, ci, co]
      M[e, di*WC + w_in*C + ci, WC + w_out*C + co] = Kdw[e, di, dj, ci] * Kpw[e, ci, co]
    where dj = w_in - w_out + 1 inside the band, 0 elsewhere."""
    E, _, _, C, _ = kconv.shape
    WC = width * C
    ksep = kdw[:, :, :, 0, :, None] * kpw[:, None, None, :, :]       # (E,3,3,C,C)
    sel = np.zeros((3, width, width), np.float32)                    # S[dj, w_in, w_out]
    for dj in range(3):
        for w_out in range(width):
            w_in = w_out + dj - 1
            if 0 <= w_in < width:
                sel[dj, w_in, w_out] = 1.0

    def band(k):                                                     # -> (E,3,WC,WC)
        return jnp.einsum('dab,ehdio->ehaibo', sel, k).reshape(E, 3, WC, WC)

    m = jnp.concatenate([band(kconv), band(ksep)], axis=-1)          # (E,3,WC,2WC)
    return m.reshape(E, 3 * WC, 2 * WC)


def mixed_operation_forward(x_nhwc, alphas, kconv, kdw, kpw):
    """Batched over E independent MixedOperation instances (DARTS edges).

    x_nhwc: (E, B, H, W, C); alphas: (E, 6) raw mixture weights;
    kconv: (E, 3, 3, C, C) HWIO; kdw: (E, 3, 3, 1, C) depthwise HWIO; kpw: (E, C, C).
    """
    E, B, H, W, C = x_nhwc.shape
    assert W & (W - 1) == 0, "width must be a power of two (BN roll-tree reduction)"
    WC = W * C

    x = x_nhwc.astype(jnp.float32)
    xp = jnp.pad(x, ((0, 0), (0, 0), (1, 1), (0, 0), (0, 0)))           # H pad only
    xl = jnp.pad(xp, ((0, 0), (0, 0), (0, 0), (1, 0), (0, 0)))[:, :, :, :W, :]
    xr = jnp.pad(xp, ((0, 0), (0, 0), (0, 0), (0, 1), (0, 0)))[:, :, :, 1:, :]
    xs = jnp.stack([xl, xp, xr], axis=1).reshape(E, 3, B, H + 2, WC)    # lane-folded

    m = _banded_weights(kconv.astype(jnp.float32), kdw.astype(jnp.float32),
                        kpw.astype(jnp.float32), W).astype(jnp.bfloat16)

    out = pl.pallas_call(
        functools.partial(_mixed_op_kernel, channels=C),
        grid=(E,),
        out_shape=jax.ShapeDtypeStruct((E, B, H, WC), jnp.float32),
        in_specs=[
            pl.BlockSpec(memory_space=pltpu.MemorySpace.SMEM),           # alphas (E,6)
            pl.BlockSpec((None, 3, B, H + 2, WC), lambda e: (e, 0, 0, 0, 0)),
            pl.BlockSpec((None, 3 * WC, 2 * WC), lambda e: (e, 0, 0)),
        ],
        out_specs=pl.BlockSpec((None, B, H, WC), lambda e: (e, 0, 0, 0)),
        compiler_params=pltpu.CompilerParams(
            dimension_semantics=("parallel",)),
    )(alphas.astype(jnp.float32), xs, m)
    return out.reshape(E, B, H, W, C)


def _reference_mixed_operation(x_nhwc, alphas, kconv, kdw, kpw):
    """Pure-JAX reference mirroring the PyTorch module (training-mode BN)."""
    B, H, W, C = x_nhwc.shape
    zp = jnp.pad(x_nhwc, ((0, 0), (1, 1), (1, 1), (0, 0)))
    ninf = jnp.pad(x_nhwc, ((0, 0), (1, 1), (1, 1), (0, 0)), constant_values=-jnp.inf)
    mx = x_nhwc
    av = jnp.zeros_like(x_nhwc)
    conv = jnp.zeros_like(x_nhwc)
    dw = jnp.zeros_like(x_nhwc)
    for di in range(3):
        for dj in range(3):
            tz = zp[:, di:di + H, dj:dj + W, :]
            tn = ninf[:, di:di + H, dj:dj + W, :]
            mx = jnp.maximum(mx, tn)
            av = av + tz
            conv = conv + jnp.einsum('bhwi,io->bhwo', tz, kconv[di, dj],
                                     precision=jax.lax.Precision.HIGHEST)
            dw = dw + tz * kdw[di, dj, 0]
    av = av / 9.0
    sep = jnp.einsum('bhwi,io->bhwo', dw, kpw, precision=jax.lax.Precision.HIGHEST)

    def bn_relu(v):
        mean = jnp.mean(v, axis=(0, 1, 2))
        var = jnp.mean((v - mean) ** 2, axis=(0, 1, 2))
        return jnp.maximum((v - mean) * jax.lax.rsqrt(var + BN_EPS), 0.0)

    return (alphas[0] * mx + alphas[1] * av + alphas[2] * bn_relu(conv)
            + alphas[3] * bn_relu(sep) + alphas[4] * x_nhwc)


if __name__ == "__main__":
    # E=4 MixedOperation(AVAILABLE_OPS, in_channels=8, out_channels=8) edges,
    # each on a (2, 8, 16, 16) input (W*C = 128 lanes).
    E, B, C, H, W = 4, 2, 8, 16, 16
    key = jax.random.PRNGKey(0)
    kx, ka, k1, k2, k3 = jax.random.split(key, 5)

    x_nchw = jax.random.normal(kx, (E, B, C, H, W), jnp.float32)      # PyTorch layout
    x_nhwc = jnp.transpose(x_nchw, (0, 1, 3, 4, 2))                   # kernel layout

    alphas = jax.nn.softmax(jax.random.normal(ka, (E, len(AVAILABLE_OPS)), jnp.float32),
                            axis=-1)
    kconv = (jax.random.uniform(k1, (E, 3, 3, C, C), jnp.float32, -1.0, 1.0)
             / float(np.sqrt(9 * C)))
    kdw = jax.random.uniform(k2, (E, 3, 3, 1, C), jnp.float32, -1.0, 1.0) / 3.0
    kpw = jax.random.uniform(k3, (E, C, C), jnp.float32, -1.0, 1.0) / float(np.sqrt(C))

    fwd = jax.jit(mixed_operation_forward)
    out_nhwc = jax.block_until_ready(fwd(x_nhwc, alphas, kconv, kdw, kpw))

    ref = jax.vmap(_reference_mixed_operation)(x_nhwc, alphas, kconv, kdw, kpw)
    assert out_nhwc.shape == (E, B, H, W, C)
    assert bool(jnp.all(jnp.isfinite(out_nhwc)))
    max_err = float(jnp.max(jnp.abs(out_nhwc - ref)))
    assert bool(jnp.allclose(out_nhwc, ref, atol=1e-2, rtol=1e-2)), max_err

    out_nchw = jnp.transpose(out_nhwc, (0, 1, 4, 2, 3))               # back to PyTorch
    assert out_nchw.shape == (E, B, C, H, W)
    print("KERNEL_OK")
</pallas_src>

<mosaic_0001>
module attributes {stable_mosaic.version = 11 : i64} {
  func.func @_mixed_op_kernel(%arg0: i32, %arg1: memref<4x6xf32, #tpu.memory_space<smem>>, %arg2: memref<1x3x2x18x128xf32, #tpu.memory_space<vmem>>, %arg3: memref<1x384x256xbf16, #tpu.memory_space<vmem>>, %arg4: memref<1x2x16x128xf32, #tpu.memory_space<vmem>>) attributes {dimension_semantics = [#tpu.dimension_semantics<parallel>], iteration_bounds = array<i64: 4>, scalar_prefetch = 0 : i64, scratch_operands = 0 : i64, tpu.core_type = #tpu.core_type<tc>, window_params = [{transform_indices = @transform_0, window_bounds = array<i64: 4, 6>}, {transform_indices = @transform_1, window_bounds = array<i64: 1, 3, 2, 18, 128>}, {transform_indices = @transform_2, window_bounds = array<i64: 1, 384, 256>}, {transform_indices = @transform_3, window_bounds = array<i64: 1, 2, 16, 128>}]} {
    %c0 = arith.constant 0 : index
    %c0_0 = arith.constant 0 : index
    %c0_1 = arith.constant 0 : index
    %c0_2 = arith.constant 0 : index
    %c0_3 = arith.constant 0 : index
    %0 = vector.load %arg2[%c0, %c0_0, %c0_1, %c0_2, %c0_3] : memref<1x3x2x18x128xf32, #tpu.memory_space<vmem>>, vector<1x1x2x18x128xf32>
    %1 = vector.shape_cast %0 : vector<1x1x2x18x128xf32> to vector<2x18x128xf32>
    %c0_4 = arith.constant 0 : index
    %c1 = arith.constant 1 : index
    %c0_5 = arith.constant 0 : index
    %c0_6 = arith.constant 0 : index
    %c0_7 = arith.constant 0 : index
    %2 = vector.load %arg2[%c0_4, %c1, %c0_5, %c0_6, %c0_7] : memref<1x3x2x18x128xf32, #tpu.memory_space<vmem>>, vector<1x1x2x18x128xf32>
    %3 = vector.shape_cast %2 : vector<1x1x2x18x128xf32> to vector<2x18x128xf32>
    %c0_8 = arith.constant 0 : index
    %c2 = arith.constant 2 : index
    %c0_9 = arith.constant 0 : index
    %c0_10 = arith.constant 0 : index
    %c0_11 = arith.constant 0 : index
    %4 = vector.load %arg2[%c0_8, %c2, %c0_9, %c0_10, %c0_11] : memref<1x3x2x18x128xf32, #tpu.memory_space<vmem>>, vector<1x1x2x18x128xf32>
    %5 = vector.shape_cast %4 : vector<1x1x2x18x128xf32> to vector<2x18x128xf32>
    %6 = arith.addf %1, %3 : vector<2x18x128xf32>
    %7 = arith.addf %6, %5 : vector<2x18x128xf32>
    %8 = vector.extract_strided_slice %7 {offsets = [0, 0, 0], sizes = [2, 16, 128], strides = [1, 1, 1]} : vector<2x18x128xf32> to vector<2x16x128xf32>
    %9 = vector.extract_strided_slice %7 {offsets = [0, 1, 0], sizes = [2, 16, 128], strides = [1, 1, 1]} : vector<2x18x128xf32> to vector<2x16x128xf32>
    %10 = arith.addf %8, %9 : vector<2x16x128xf32>
    %11 = vector.extract_strided_slice %7 {offsets = [0, 2, 0], sizes = [2, 16, 128], strides = [1, 1, 1]} : vector<2x18x128xf32> to vector<2x16x128xf32>
    %12 = arith.addf %10, %11 : vector<2x16x128xf32>
    %cst = arith.constant 0.111111112 : f32
    %13 = vector.broadcast %cst : f32 to vector<2x16x128xf32>
    %14 = arith.mulf %12, %13 : vector<2x16x128xf32>
    %15 = tpu.iota {dimensions = array<i32: 2>} : vector<1x1x128xi32>
    %c8_i32 = arith.constant 8 : i32
    %16 = vector.broadcast %c8_i32 : i32 to vector<1x1x128xi32>
    %17 = arith.cmpi sge, %15, %16 : vector<1x1x128xi32>
    %cst_12 = arith.constant 0xFF800000 : f32
    %18 = vector.shape_cast %17 : vector<1x1x128xi1> to vector<1x1x128xi1>
    %19 = vector.broadcast %18 : vector<1x1x128xi1> to vector<2x18x128xi1>
    %20 = vector.broadcast %cst_12 : f32 to vector<2x18x128xf32>
    %21 = arith.select %19, %1, %20 : vector<2x18x128xi1>, vector<2x18x128xf32>
    %c120_i32 = arith.constant 120 : i32
    %22 = vector.broadcast %c120_i32 : i32 to vector<1x1x128xi32>
    %23 = arith.cmpi slt, %15, %22 : vector<1x1x128xi32>
    %cst_13 = arith.constant 0xFF800000 : f32
    %24 = vector.shape_cast %23 : vector<1x1x128xi1> to vector<1x1x128xi1>
    %25 = vector.broadcast %24 : vector<1x1x128xi1> to vector<2x18x128xi1>
    %26 = vector.broadcast %cst_13 : f32 to vector<2x18x128xf32>
    %27 = arith.select %25, %5, %26 : vector<2x18x128xi1>, vector<2x18x128xf32>
    %28 = arith.maximumf %21, %27 : vector<2x18x128xf32>
    %29 = arith.maximumf %3, %28 : vector<2x18x128xf32>
    %30 = tpu.iota {dimensions = array<i32: 1>} : vector<1x18x1xi32>
    %c1_i32 = arith.constant 1 : i32
    %31 = vector.broadcast %c1_i32 : i32 to vector<1x18x1xi32>
    %32 = arith.cmpi sge, %30, %31 : vector<1x18x1xi32>
    %c16_i32 = arith.constant 16 : i32
    %33 = vector.broadcast %c16_i32 : i32 to vector<1x18x1xi32>
    %34 = arith.cmpi sle, %30, %33 : vector<1x18x1xi32>
    %35 = arith.andi %32, %34 : vector<1x18x1xi1>
    %cst_14 = arith.constant 0xFF800000 : f32
    %36 = vector.shape_cast %35 : vector<1x18x1xi1> to vector<1x18x1xi1>
    %37 = vector.broadcast %36 : vector<1x18x1xi1> to vector<2x18x128xi1>
    %38 = vector.broadcast %cst_14 : f32 to vector<2x18x128xf32>
    %39 = arith.select %37, %29, %38 : vector<2x18x128xi1>, vector<2x18x128xf32>
    %40 = vector.extract_strided_slice %39 {offsets = [0, 0, 0], sizes = [2, 16, 128], strides = [1, 1, 1]} : vector<2x18x128xf32> to vector<2x16x128xf32>
    %41 = vector.extract_strided_slice %39 {offsets = [0, 1, 0], sizes = [2, 16, 128], strides = [1, 1, 1]} : vector<2x18x128xf32> to vector<2x16x128xf32>
    %42 = vector.extract_strided_slice %39 {offsets = [0, 2, 0], sizes = [2, 16, 128], strides = [1, 1, 1]} : vector<2x18x128xf32> to vector<2x16x128xf32>
    %43 = arith.maximumf %41, %42 : vector<2x16x128xf32>
    %44 = arith.maximumf %40, %43 : vector<2x16x128xf32>
    %45 = vector.extract_strided_slice %3 {offsets = [0, 0, 0], sizes = [2, 16, 128], strides = [1, 1, 1]} : vector<2x18x128xf32> to vector<2x16x128xf32>
    %46 = vector.extract_strided_slice %3 {offsets = [0, 1, 0], sizes = [2, 16, 128], strides = [1, 1, 1]} : vector<2x18x128xf32> to vector<2x16x128xf32>
    %47 = vector.extract_strided_slice %3 {offsets = [0, 2, 0], sizes = [2, 16, 128], strides = [1, 1, 1]} : vector<2x18x128xf32> to vector<2x16x128xf32>
    %48 = tpu.concatenate %45, %46, %47 in 2 : vector<2x16x128xf32>, vector<2x16x128xf32>, vector<2x16x128xf32> -> vector<2x16x384xf32>
    %49 = vector.shape_cast %48 : vector<2x16x384xf32> to vector<32x384xf32>
    %50 = arith.truncf %49 : vector<32x384xf32> to vector<32x384xbf16>
    %c0_15 = arith.constant 0 : index
    %c0_16 = arith.constant 0 : index
    %c0_17 = arith.constant 0 : index
    %51 = vector.load %arg3[%c0_15, %c0_16, %c0_17] : memref<1x384x256xbf16, #tpu.memory_space<vmem>>, vector<1x384x256xbf16>
    %52 = vector.shape_cast %51 : vector<1x384x256xbf16> to vector<384x256xbf16>
    %cst_18 = arith.constant dense<0.000000e+00> : vector<32x256xf32>
    %53 = tpu.matmul %50, %52, %cst_18 {dimension_numbers = #tpu.dot_dimension_numbers<[1], [0], [0], [1], [0, 0, 1, 1], [], []>} : vector<32x384xbf16>, vector<384x256xbf16>, vector<32x256xf32> -> vector<32x256xf32>
    %cst_19 = arith.constant dense<0.000000e+00> : vector<256xf32>
    %54 = vector.multi_reduction <add>, %53, %cst_19 [0] : vector<32x256xf32> to vector<256xf32>
    %55 = vector.shape_cast %54 : vector<256xf32> to vector<1x256xf32>
    %56 = arith.mulf %53, %53 : vector<32x256xf32>
    %cst_20 = arith.constant dense<0.000000e+00> : vector<256xf32>
    %57 = vector.multi_reduction <add>, %56, %cst_20 [0] : vector<32x256xf32> to vector<256xf32>
    %58 = vector.shape_cast %57 : vector<256xf32> to vector<1x256xf32>
    %59 = vector.extract_strided_slice %53 {offsets = [0, 0], sizes = [32, 128], strides = [1, 1]} : vector<32x256xf32> to vector<32x128xf32>
    %60 = vector.extract_strided_slice %55 {offsets = [0, 0], sizes = [1, 128], strides = [1, 1]} : vector<1x256xf32> to vector<1x128xf32>
    %61 = vector.extract_strided_slice %58 {offsets = [0, 0], sizes = [1, 128], strides = [1, 1]} : vector<1x256xf32> to vector<1x128xf32>
    %c64_i32 = arith.constant 64 : i32
    %62 = tpu.dynamic_rotate %60 by %c64_i32 dim 1 : vector<1x128xf32>, i32 -> vector<1x128xf32>
    %63 = arith.addf %60, %62 : vector<1x128xf32>
    %c32_i32 = arith.constant 32 : i32
    %64 = tpu.dynamic_rotate %63 by %c32_i32 dim 1 : vector<1x128xf32>, i32 -> vector<1x128xf32>
    %65 = arith.addf %63, %64 : vector<1x128xf32>
    %c16_i32_21 = arith.constant 16 : i32
    %66 = tpu.dynamic_rotate %65 by %c16_i32_21 dim 1 : vector<1x128xf32>, i32 -> vector<1x128xf32>
    %67 = arith.addf %65, %66 : vector<1x128xf32>
    %c8_i32_22 = arith.constant 8 : i32
    %68 = tpu.dynamic_rotate %67 by %c8_i32_22 dim 1 : vector<1x128xf32>, i32 -> vector<1x128xf32>
    %69 = arith.addf %67, %68 : vector<1x128xf32>
    %cst_23 = arith.constant 0.001953125 : f32
    %70 = vector.broadcast %cst_23 : f32 to vector<1x128xf32>
    %71 = arith.mulf %69, %70 : vector<1x128xf32>
    %c64_i32_24 = arith.constant 64 : i32
    %72 = tpu.dynamic_rotate %61 by %c64_i32_24 dim 1 : vector<1x128xf32>, i32 -> vector<1x128xf32>
    %73 = arith.addf %61, %72 : vector<1x128xf32>
    %c32_i32_25 = arith.constant 32 : i32
    %74 = tpu.dynamic_rotate %73 by %c32_i32_25 dim 1 : vector<1x128xf32>, i32 -> vector<1x128xf32>
    %75 = arith.addf %73, %74 : vector<1x128xf32>
    %c16_i32_26 = arith.constant 16 : i32
    %76 = tpu.dynamic_rotate %75 by %c16_i32_26 dim 1 : vector<1x128xf32>, i32 -> vector<1x128xf32>
    %77 = arith.addf %75, %76 : vector<1x128xf32>
    %c8_i32_27 = arith.constant 8 : i32
    %78 = tpu.dynamic_rotate %77 by %c8_i32_27 dim 1 : vector<1x128xf32>, i32 -> vector<1x128xf32>
    %79 = arith.addf %77, %78 : vector<1x128xf32>
    %cst_28 = arith.constant 0.001953125 : f32
    %80 = vector.broadcast %cst_28 : f32 to vector<1x128xf32>
    %81 = arith.mulf %79, %80 : vector<1x128xf32>
    %82 = arith.mulf %71, %71 : vector<1x128xf32>
    %83 = arith.subf %81, %82 : vector<1x128xf32>
    %84 = vector.broadcast %71 : vector<1x128xf32> to vector<32x128xf32>
    %85 = arith.subf %59, %84 : vector<32x128xf32>
    %cst_29 = arith.constant 9.99999974E-6 : f32
    %86 = vector.broadcast %cst_29 : f32 to vector<1x128xf32>
    %87 = arith.addf %83, %86 : vector<1x128xf32>
    %88 = math.rsqrt %87 : vector<1x128xf32>
    %89 = vector.broadcast %88 : vector<1x128xf32> to vector<32x128xf32>
    %90 = arith.mulf %85, %89 : vector<32x128xf32>
    %cst_30 = arith.constant 0.000000e+00 : f32
    %91 = vector.broadcast %cst_30 : f32 to vector<32x128xf32>
    %92 = arith.maximumf %90, %91 : vector<32x128xf32>
    %93 = vector.shape_cast %92 : vector<32x128xf32> to vector<2x16x128xf32>
    %94 = vector.extract_strided_slice %53 {offsets = [0, 128], sizes = [32, 128], strides = [1, 1]} : vector<32x256xf32> to vector<32x128xf32>
    %95 = vector.extract_strided_slice %55 {offsets = [0, 128], sizes = [1, 128], strides = [1, 1]} : vector<1x256xf32> to vector<1x128xf32>
    %96 = vector.extract_strided_slice %58 {offsets = [0, 128], sizes = [1, 128], strides = [1, 1]} : vector<1x256xf32> to vector<1x128xf32>
    %c64_i32_31 = arith.constant 64 : i32
    %97 = tpu.dynamic_rotate %95 by %c64_i32_31 dim 1 : vector<1x128xf32>, i32 -> vector<1x128xf32>
    %98 = arith.addf %95, %97 : vector<1x128xf32>
    %c32_i32_32 = arith.constant 32 : i32
    %99 = tpu.dynamic_rotate %98 by %c32_i32_32 dim 1 : vector<1x128xf32>, i32 -> vector<1x128xf32>
    %100 = arith.addf %98, %99 : vector<1x128xf32>
    %c16_i32_33 = arith.constant 16 : i32
    %101 = tpu.dynamic_rotate %100 by %c16_i32_33 dim 1 : vector<1x128xf32>, i32 -> vector<1x128xf32>
    %102 = arith.addf %100, %101 : vector<1x128xf32>
    %c8_i32_34 = arith.constant 8 : i32
    %103 = tpu.dynamic_rotate %102 by %c8_i32_34 dim 1 : vector<1x128xf32>, i32 -> vector<1x128xf32>
    %104 = arith.addf %102, %103 : vector<1x128xf32>
    %cst_35 = arith.constant 0.001953125 : f32
    %105 = vector.broadcast %cst_35 : f32 to vector<1x128xf32>
    %106 = arith.mulf %104, %105 : vector<1x128xf32>
    %c64_i32_36 = arith.constant 64 : i32
    %107 = tpu.dynamic_rotate %96 by %c64_i32_36 dim 1 : vector<1x128xf32>, i32 -> vector<1x128xf32>
    %108 = arith.addf %96, %107 : vector<1x128xf32>
    %c32_i32_37 = arith.constant 32 : i32
    %109 = tpu.dynamic_rotate %108 by %c32_i32_37 dim 1 : vector<1x128xf32>, i32 -> vector<1x128xf32>
    %110 = arith.addf %108, %109 : vector<1x128xf32>
    %c16_i32_38 = arith.constant 16 : i32
    %111 = tpu.dynamic_rotate %110 by %c16_i32_38 dim 1 : vector<1x128xf32>, i32 -> vector<1x128xf32>
    %112 = arith.addf %110, %111 : vector<1x128xf32>
    %c8_i32_39 = arith.constant 8 : i32
    %113 = tpu.dynamic_rotate %112 by %c8_i32_39 dim 1 : vector<1x128xf32>, i32 -> vector<1x128xf32>
    %114 = arith.addf %112, %113 : vector<1x128xf32>
    %cst_40 = arith.constant 0.001953125 : f32
    %115 = vector.broadcast %cst_40 : f32 to vector<1x128xf32>
    %116 = arith.mulf %114, %115 : vector<1x128xf32>
    %117 = arith.mulf %106, %106 : vector<1x128xf32>
    %118 = arith.subf %116, %117 : vector<1x128xf32>
    %119 = vector.broadcast %106 : vector<1x128xf32> to vector<32x128xf32>
    %120 = arith.subf %94, %119 : vector<32x128xf32>
    %cst_41 = arith.constant 9.99999974E-6 : f32
    %121 = vector.broadcast %cst_41 : f32 to vector<1x128xf32>
    %122 = arith.addf %118, %121 : vector<1x128xf32>
    %123 = math.rsqrt %122 : vector<1x128xf32>
    %124 = vector.broadcast %123 : vector<1x128xf32> to vector<32x128xf32>
    %125 = arith.mulf %120, %124 : vector<32x128xf32>
    %cst_42 = arith.constant 0.000000e+00 : f32
    %126 = vector.broadcast %cst_42 : f32 to vector<32x128xf32>
    %127 = arith.maximumf %125, %126 : vector<32x128xf32>
    %128 = vector.shape_cast %127 : vector<32x128xf32> to vector<2x16x128xf32>
    %129 = vector.extract_strided_slice %3 {offsets = [0, 1, 0], sizes = [2, 16, 128], strides = [1, 1, 1]} : vector<2x18x128xf32> to vector<2x16x128xf32>
    %130 = arith.index_cast %arg0 : i32 to index
    %c0_43 = arith.constant 0 : index
    %131 = memref.load %arg1[%130, %c0_43] : memref<4x6xf32, #tpu.memory_space<smem>>
    %132 = vector.broadcast %131 : f32 to vector<2x16x128xf32>
    %133 = arith.mulf %132, %44 : vector<2x16x128xf32>
    %134 = arith.index_cast %arg0 : i32 to index
    %c1_44 = arith.constant 1 : index
    %135 = memref.load %arg1[%134, %c1_44] : memref<4x6xf32, #tpu.memory_space<smem>>
    %136 = vector.broadcast %135 : f32 to vector<2x16x128xf32>
    %137 = arith.mulf %136, %14 : vector<2x16x128xf32>
    %138 = arith.addf %133, %137 : vector<2x16x128xf32>
    %139 = arith.index_cast %arg0 : i32 to index
    %c2_45 = arith.constant 2 : index
    %140 = memref.load %arg1[%139, %c2_45] : memref<4x6xf32, #tpu.memory_space<smem>>
    %141 = vector.broadcast %140 : f32 to vector<2x16x128xf32>
    %142 = arith.mulf %141, %93 : vector<2x16x128xf32>
    %143 = arith.addf %138, %142 : vector<2x16x128xf32>
    %144 = arith.index_cast %arg0 : i32 to index
    %c3 = arith.constant 3 : index
    %145 = memref.load %arg1[%144, %c3] : memref<4x6xf32, #tpu.memory_space<smem>>
    %146 = vector.broadcast %145 : f32 to vector<2x16x128xf32>
    %147 = arith.mulf %146, %128 : vector<2x16x128xf32>
    %148 = arith.addf %143, %147 : vector<2x16x128xf32>
    %149 = arith.index_cast %arg0 : i32 to index
    %c4 = arith.constant 4 : index
    %150 = memref.load %arg1[%149, %c4] : memref<4x6xf32, #tpu.memory_space<smem>>
    %151 = vector.broadcast %150 : f32 to vector<2x16x128xf32>
    %152 = arith.mulf %151, %129 : vector<2x16x128xf32>
    %153 = arith.addf %148, %152 : vector<2x16x128xf32>
    %c0_46 = arith.constant 0 : index
    %c0_47 = arith.constant 0 : index
    %c0_48 = arith.constant 0 : index
    %c0_49 = arith.constant 0 : index
    %154 = vector.load %arg4[%c0_46, %c0_47, %c0_48, %c0_49] : memref<1x2x16x128xf32, #tpu.memory_space<vmem>>, vector<1x2x16x128xf32>
    %155 = vector.shape_cast %154 : vector<1x2x16x128xf32> to vector<2x16x128xf32>
    %156 = vector.shape_cast %153 : vector<2x16x128xf32> to vector<1x2x16x128xf32>
    tpu.vector_store %arg4[%c0_46, %c0_47, %c0_48, %c0_49], %156 {strides = array<i32>} : memref<1x2x16x128xf32, #tpu.memory_space<vmem>>, vector<1x2x16x128xf32>,
    return
  }
  func.func @transform_0(%arg0: i32) -> (i32, i32) {
    %c0_i32 = arith.constant 0 : i32
    %c0_i32_0 = arith.constant 0 : i32
    %c0_i32_1 = arith.constant 0 : i32
    return %c0_i32, %c0_i32_0 : i32, i32
  }
  func.func @transform_1(%arg0: i32) -> (i32, i32, i32, i32, i32) {
    %c0_i32 = arith.constant 0 : i32
    %c0_i32_0 = arith.constant 0 : i32
    %c0_i32_1 = arith.constant 0 : i32
    %c0_i32_2 = arith.constant 0 : i32
    %c0_i32_3 = arith.constant 0 : i32
    return %arg0, %c0_i32, %c0_i32_0, %c0_i32_1, %c0_i32_2 : i32, i32, i32, i32, i32
  }
  func.func @transform_2(%arg0: i32) -> (i32, i32, i32) {
    %c0_i32 = arith.constant 0 : i32
    %c0_i32_0 = arith.constant 0 : i32
    %c0_i32_1 = arith.constant 0 : i32
    return %arg0, %c0_i32, %c0_i32_0 : i32, i32, i32
  }
  func.func @transform_3(%arg0: i32) -> (i32, i32, i32, i32) {
    %c0_i32 = arith.constant 0 : i32
    %c0_i32_0 = arith.constant 0 : i32
    %c0_i32_1 = arith.constant 0 : i32
    %c0_i32_2 = arith.constant 0 : i32
    return %arg0, %c0_i32, %c0_i32_0, %c0_i32_1 : i32, i32, i32, i32
  }
}

</mosaic_0001>

<llo_original>
// kernel: mixed_operation_forward.1
$region0: #{mixed_operation_forward.1}
  #allocation0 [shape = 'u32[]', space=smem, size = 0x4, offset = 0x4, fixed_abs, tag = 'smem constant byte address 0x4 - core index']
  #allocation1 [shape = 'u32[72,128]{1,0:T(1,128)}', space=vmem, size = 0x9000, scoped, tag = 'internal scratch']
  %s0 = inlined_call_operand.vmem [shape: f32[4,6], index: 0, kind: input, shape index: {}]
  %s1 = inlined_call_operand.vmem [shape: f32[4,3,2,18,128], index: 1, kind: input, shape index: {}]
  %s2 = inlined_call_operand.vmem [shape: bf16[4,384,256], index: 2, kind: input, shape index: {}]
  %s3 = inlined_call_operand.vmem [shape: f32[4,2,16,128], index: 3, kind: output, shape index: {}]
  %s4 = sld [smem:[#allocation0]]
  $region49: #{mixed_operation_forward.1} parent=0
    _
  %s6 = ssub.s32 1, %s4
  %s7 = scalar_select 0, %s6, %s4
  $region1: #{mixed_operation_forward.1} parent=0
    #allocation2 [shape = 'u8[2048]{0}', space=smem, size = 0x800, scoped, tag = 'input window, operand 0, single buffered']
    #allocation3 [shape = 's32[2]{0}', space=sflag, size = 0x8, scoped, tag = 'scoped memory for mixed_operation_forward.1']
    %8 = vsyncpa [#allocation3], 0
    loop: start=0, step=1, limit=6
    $region2: #{mixed_operation_forward.1} parent=1 // loop_pre_header
      _
    $region3: #{mixed_operation_forward.1} parent=1 // loop_header
      %s10 = sphi 0, %s14
      %p11 = scmp.ge.s32.totalorder %s10, 6
      %s18 = sphi 0, %s18
      %s20 = sphi 0, %s18
      %s21 = sphi 0, %s20
      %s35 = sphi 0, %s21
      %s41 = sphi 0, %s43
      %s44 = sphi 0, %s41
      %s45 = sphi 0, %s44
      %s61 = sphi 0, %s45
      %s67 = sphi 0, %s69
      %s70 = sphi 0, %s67
      %s71 = sphi 0, %s70
      %s87 = sphi 0, %s71
      %s93 = sphi 0, %s95
      %s96 = sphi 0, %s93
      %s97 = sphi 0, %s96
      %s113 = sphi 0, %s97
    $region4: #{mixed_operation_forward.1} parent=1 // loop_header_branch
      %13 = sbr.rel (%p11) target = $region8
    $region5: #{mixed_operation_forward.1} parent=1 // loop_body
      %s15 = ssub.s32 %s10, 1
      %s16 = ssub.s32 %s10, 2
      %s17 = sadd.s32 %s10, 1
      %s19 = sadd.s32 %s18, 1
      %p22 = scmp.eq.s32.totalorder %s10, 3
      %p23 = scmp.ne.s32.totalorder %s18, %s20
      %p24 = scmp.eq.s32.totalorder %s10, 0
      %p25 = por %p23, %p24
      %p26 = scmp.ne.s32.totalorder %s18, %s20
      %p27 = scmp.eq.s32.totalorder %s15, 3
      %p28 = por %p26, %p27
      %p29 = scmp.ne.s32.totalorder %s20, %s21
      %p30 = scmp.eq.s32.totalorder %s15, 0
      %p31 = por %p29, %p30
      %p32 = scmp.ne.s32.totalorder %s20, %s21
      %p33 = scmp.eq.s32.totalorder %s16, 3
      %p34 = por %p32, %p33
      %p36 = scmp.ne.s32.totalorder %s21, %s35
      %p37 = scmp.eq.s32.totalorder %s16, 0
      %p38 = por %p36, %p37
      %s39 = ssub.s32 %s10, %s17
      %p40 = scmp.eq.s32.totalorder %s39, 0
      %s42 = sadd.s32 %s41, 1
      %s43 = scalar_select %p40, %s41, %s42
      %p46 = pneg %p40
      %p47 = scmp.eq.s32.totalorder %s10, 3
      %p48 = por %p46, %p47
      %p49 = scmp.ne.s32.totalorder %s41, %s44
      %p50 = scmp.eq.s32.totalorder %s10, 0
      %p51 = por %p49, %p50
      %p52 = scmp.ne.s32.totalorder %s41, %s44
      %p53 = scmp.eq.s32.totalorder %s15, 3
      %p54 = por %p52, %p53
      %p55 = scmp.ne.s32.totalorder %s44, %s45
      %p56 = scmp.eq.s32.totalorder %s15, 0
      %p57 = por %p55, %p56
      %p58 = scmp.ne.s32.totalorder %s44, %s45
      %p59 = scmp.eq.s32.totalorder %s16, 3
      %p60 = por %p58, %p59
      %p62 = scmp.ne.s32.totalorder %s45, %s61
      %p63 = scmp.eq.s32.totalorder %s16, 0
      %p64 = por %p62, %p63
      %s65 = ssub.s32 %s10, %s17
      %p66 = scmp.eq.s32.totalorder %s65, 0
      %s68 = sadd.s32 %s67, 1
      %s69 = scalar_select %p66, %s67, %s68
      %p72 = pneg %p66
      %p73 = scmp.eq.s32.totalorder %s10, 3
      %p74 = por %p72, %p73
      %p75 = scmp.ne.s32.totalorder %s67, %s70
      %p76 = scmp.eq.s32.totalorder %s10, 0
      %p77 = por %p75, %p76
      %p78 = scmp.ne.s32.totalorder %s67, %s70
      %p79 = scmp.eq.s32.totalorder %s15, 3
      %p80 = por %p78, %p79
      %p81 = scmp.ne.s32.totalorder %s70, %s71
      %p82 = scmp.eq.s32.totalorder %s15, 0
      %p83 = por %p81, %p82
      %p84 = scmp.ne.s32.totalorder %s70, %s71
      %p85 = scmp.eq.s32.totalorder %s16, 3
      %p86 = por %p84, %p85
      %p88 = scmp.ne.s32.totalorder %s71, %s87
      %p89 = scmp.eq.s32.totalorder %s16, 0
      %p90 = por %p88, %p89
      %s91 = ssub.s32 %s10, %s17
      %p92 = scmp.eq.s32.totalorder %s91, 0
      %s94 = sadd.s32 %s93, 1
      %s95 = scalar_select %p92, %s93, %s94
      %p98 = pneg %p92
      %p99 = scmp.eq.s32.totalorder %s10, 3
      %p100 = por %p98, %p99
      %p101 = scmp.ne.s32.totalorder %s93, %s96
      %p102 = scmp.eq.s32.totalorder %s10, 0
      %p103 = por %p101, %p102
      %p104 = scmp.ne.s32.totalorder %s93, %s96
      %p105 = scmp.eq.s32.totalorder %s15, 3
      %p106 = por %p104, %p105
      %p107 = scmp.ne.s32.totalorder %s96, %s97
      %p108 = scmp.eq.s32.totalorder %s15, 0
      %p109 = por %p107, %p108
      %p110 = scmp.ne.s32.totalorder %s96, %s97
      %p111 = scmp.eq.s32.totalorder %s16, 3
      %p112 = por %p110, %p111
      %p114 = scmp.ne.s32.totalorder %s97, %s113
      %p115 = scmp.eq.s32.totalorder %s16, 0
      %p116 = por %p114, %p115
      %p117 = scmp.le.s32.totalorder 1, %s10
      %p118 = scmp.lt.s32.totalorder %s10, 5
      %p119 = pnand %p117, %p118
      %p120 = pneg %p119
      // Predicated region
      $region9: #{mixed_operation_forward.1} parent=5 // pred_check
        _
      $region10: #{mixed_operation_forward.1} parent=5 // pred_check_branch
        %122 = sbr.rel (%p119) target = $region12
      $region11: #{mixed_operation_forward.1} parent=5 // pred_region
        %s123 = ssub.s32 %s10, 1
        // Predicated region
        $region13: #{mixed_operation_forward.1} parent=11 // pred_check
          %p124 = pneg %p31
        $region14: #{mixed_operation_forward.1} parent=11 // pred_check_branch
          %126 = sbr.rel (%p124) target = $region16
        $region15: #{mixed_operation_forward.1} parent=11 // pred_region
          %128 = vsyncadd [#allocation3], 0
          %s130 = sshll.u32 %s0, 4
          %s131 = int_to_ptr.vmem [resolvable:$true] %s130
          %133 = dma.vmem_to_smem %s131, 64, [#allocation2], [#allocation3]
        $region16: #{mixed_operation_forward.1} parent=11 // pred_fallthru
          _
      $region12: #{mixed_operation_forward.1} parent=5 // pred_fallthru
        _
      %p134 = scmp.lt.s32.totalorder %s10, 4
      // Predicated region
      $region17: #{mixed_operation_forward.1} parent=5 // pred_check
        %p135 = pneg %p134
      $region18: #{mixed_operation_forward.1} parent=5 // pred_check_branch
        %137 = sbr.rel (%p135) target = $region20
      $region19: #{mixed_operation_forward.1} parent=5 // pred_region
        // Predicated region
        $region21: #{mixed_operation_forward.1} parent=19 // pred_check
          %p138 = pneg %p51
        $region22: #{mixed_operation_forward.1} parent=19 // pred_check_branch
          %140 = sbr.rel (%p138) target = $region24
        $region23: #{mixed_operation_forward.1} parent=19 // pred_region
          %p141 = scmp.lt.s32.totalorder %s10, 3
          %s142 = scalar_select %p141, %s10, 3
          %s143 = smul.addr %s142, 18
          %s144 = smul.addr %s143, 8
          %s145 = scalar_lea.vmem %s1, %s144
        $region24: #{mixed_operation_forward.1} parent=19 // pred_fallthru
          _
        // Predicated region
        $region25: #{mixed_operation_forward.1} parent=19 // pred_check
          %p146 = pneg %p77
        $region26: #{mixed_operation_forward.1} parent=19 // pred_check_branch
          %148 = sbr.rel (%p146) target = $region28
        $region27: #{mixed_operation_forward.1} parent=19 // pred_region
          %p149 = scmp.lt.s32.totalorder %s10, 3
          %s150 = scalar_select %p149, %s10, 3
          %s151 = smul.addr %s150, 96
          %s152 = smul.addr %s151, 4
          %s153 = scalar_lea.vmem %s2, %s152
        $region28: #{mixed_operation_forward.1} parent=19 // pred_fallthru
          _
      $region20: #{mixed_operation_forward.1} parent=5 // pred_fallthru
        _
      %p154 = scmp.le.s32.totalorder 1, %s10
      %p155 = scmp.lt.s32.totalorder %s10, 5
      %p156 = pnand %p154, %p155
      %p157 = pneg %p156
      // Predicated region
      $region29: #{mixed_operation_forward.1} parent=5 // pred_check
        _
      $region30: #{mixed_operation_forward.1} parent=5 // pred_check_branch
        %159 = sbr.rel (%p156) target = $region32
      $region31: #{mixed_operation_forward.1} parent=5 // pred_region
        %s160 = ssub.s32 %s10, 1
        // Predicated region
        $region33: #{mixed_operation_forward.1} parent=31 // pred_check
          %p161 = pneg %p31
        $region34: #{mixed_operation_forward.1} parent=31 // pred_check_branch
          %163 = sbr.rel (%p161) target = $region36
        $region35: #{mixed_operation_forward.1} parent=31 // pred_region
          %165 = dma.done [#allocation3], 64
        $region36: #{mixed_operation_forward.1} parent=31 // pred_fallthru
          _
        %166 = sfence
        %p167 = pneg %p31
        %p168 = pneg %p28
        %p169 = scmp.lt.s32.totalorder %s15, 3
        %s170 = scalar_select %p169, %s15, 3
        %s171 = smul.addr %s170, 18
        %s172 = smul.addr %s171, 8
        %s173 = scalar_lea.vmem %s1, %s172
        %p174 = pneg %p57
        %p175 = pneg %p54
        %p176 = scmp.lt.s32.totalorder %s15, 3
        %s177 = scalar_select %p176, %s15, 3
        %s178 = smul.addr %s177, 96
        %s179 = smul.addr %s178, 4
        %s180 = scalar_lea.vmem %s2, %s179
        %p181 = pneg %p83
        %p182 = pneg %p80
        %p183 = pneg %p109
        %p184 = pneg %p106
        %p185 = scmp.lt.s32.totalorder %s15, 3
        %s186 = scalar_select %p185, %s15, 3
        %s187 = smul.addr %s186, 4
        %s188 = smul.addr %s187, 8
        %s189 = scalar_lea.vmem %s3, %s188
        %p190 = scmp.lt.s32.totalorder %s15, 3
        %s191 = scalar_select %p190, %s15, 3
        %s192 = smul.addr %s191, 18
        %s193 = smul.addr %s192, 8
        %s194 = scalar_lea.vmem %s1, %s193
        %p195 = scmp.lt.s32.totalorder %s15, 3
        %s196 = scalar_select %p195, %s15, 3
        %s197 = smul.addr %s196, 96
        %s198 = smul.addr %s197, 4
        %s199 = scalar_lea.vmem %s2, %s198
        %p200 = scmp.lt.s32.totalorder %s15, 3
        %s201 = scalar_select %p200, %s15, 3
        %s202 = smul.addr %s201, 4
        %s203 = smul.addr %s202, 8
        %s204 = scalar_lea.vmem %s3, %s203
        %v205 = vld [vmem:[%s194] sm:$0xff]
        %v206 = vld [vmem:[%s194 + $0x8] sm:$0xff]
        %v207 = vld [vmem:[%s194 + $0x10] sm:$0x3]
        %v208 = vld [vmem:[%s194 + $0x18] sm:$0xff]
        %v209 = vld [vmem:[%s194 + $0x20] sm:$0xff]
        %v210 = vld [vmem:[%s194 + $0x28] sm:$0x3]
        %s211 = scalar_lea.vmem %s194, 48
        %v212 = vld [vmem:[%s211] sm:$0xff]
        %v213 = vld [vmem:[%s211 + $0x8] sm:$0xff]
        %v214 = vld [vmem:[%s211 + $0x10] sm:$0x3]
        %v215 = vld [vmem:[%s211 + $0x18] sm:$0xff]
        %v216 = vld [vmem:[%s211 + $0x20] sm:$0xff]
        %v217 = vld [vmem:[%s211 + $0x28] sm:$0x3]
        %s218 = scalar_lea.vmem %s194, 96
        %v219 = vld [vmem:[%s218] sm:$0xff]
        %v220 = vld [vmem:[%s218 + $0x8] sm:$0xff]
        %v221 = vld [vmem:[%s218 + $0x10] sm:$0x3]
        %v222 = vld [vmem:[%s218 + $0x18] sm:$0xff]
        %v223 = vld [vmem:[%s218 + $0x20] sm:$0xff]
        %v224 = vld [vmem:[%s218 + $0x28] sm:$0x3]
        %v225 = vadd.f32 %v205, %v212
        %v226 = vadd.f32 %v206, %v213
        %v227 = vadd.f32 %v207, %v214
        %v228 = vadd.f32 %v208, %v215
        %v229 = vadd.f32 %v209, %v216
        %v230 = vadd.f32 %v210, %v217
        %v231 = vadd.f32 %v225, %v219
        %v232 = vadd.f32 %v226, %v220
        %v233 = vadd.f32 %v227, %v221
        %v234 = vadd.f32 %v228, %v222
        %v235 = vadd.f32 %v229, %v223
        %v236 = vadd.f32 %v230, %v224
        %vm243 = vcmask 1046528
        %v244 = vrot.slane %v231, 1
        %v245 = vrot.slane %v232, 1
        %v246 = vsel %vm243, %v244, %v245
        %v247 = vrot.slane %v233, 1
        %v248 = vsel %vm243, %v245, %v247
        %v249 = vrot.slane %v234, 1
        %v250 = vrot.slane %v235, 1
        %v251 = vsel %vm243, %v249, %v250
        %v252 = vrot.slane %v236, 1
        %v253 = vsel %vm243, %v250, %v252
        %v258 = vadd.f32 %v231, %v246
        %v259 = vadd.f32 %v232, %v248
        %v260 = vadd.f32 %v234, %v251
        %v261 = vadd.f32 %v235, %v253
        %vm262 = vcmask 1045504
        %v263 = vrot.slane %v231, 2
        %v264 = vrot.slane %v232, 2
        %v265 = vsel %vm262, %v263, %v264
        %v266 = vrot.slane %v233, 2
        %v267 = vsel %vm262, %v264, %v266
        %v268 = vrot.slane %v234, 2
        %v269 = vrot.slane %v235, 2
        %v270 = vsel %vm262, %v268, %v269
        %v271 = vrot.slane %v236, 2
        %v272 = vsel %vm262, %v269, %v271
        %v277 = vadd.f32 %v258, %v265
        %v278 = vadd.f32 %v259, %v267
        %v279 = vadd.f32 %v260, %v270
        %v280 = vadd.f32 %v261, %v272
        %v281 = vmul.f32 %v277, 0.11111111
        %v282 = vmul.f32 %v278, 0.11111111
        %v283 = vmul.f32 %v279, 0.11111111
        %v284 = vmul.f32 %v280, 0.11111111
        %v285 = vlaneseq
        %v286 = vand.u32 %v285, 127
        %vm287 = vcmp.ge.s32.totalorder %v286, 8
        %v288 = vsel %vm287, 1, 0
        %vm289 = vcmp.eq.s32.totalorder %v288, 1
        %v290 = vsel %vm289, %v205, -inf
        %v291 = vsel %vm289, %v206, -inf
        %v292 = vsel %vm289, %v207, -inf
        %v293 = vsel %vm289, %v208, -inf
        %v294 = vsel %vm289, %v209, -inf
        %v295 = vsel %vm289, %v210, -inf
        %vm296 = vcmp.lt.s32.totalorder %v286, 120
        %v297 = vsel %vm296, 1, 0
        %vm298 = vcmp.eq.s32.totalorder %v297, 1
        %v299 = vsel %vm298, %v219, -inf
        %v300 = vsel %vm298, %v220, -inf
        %v301 = vsel %vm298, %v221, -inf
        %v302 = vsel %vm298, %v222, -inf
        %v303 = vsel %vm298, %v223, -inf
        %v304 = vsel %vm298, %v224, -inf
        %v305 = vmax.f32 %v290, %v299
        %v306 = vmax.f32 %v291, %v300
        %v307 = vmax.f32 %v292, %v301
        %v308 = vmax.f32 %v293, %v302
        %v309 = vmax.f32 %v294, %v303
        %v310 = vmax.f32 %v295, %v304
        %v311 = vmax.f32 %v212, %v305
        %v312 = vmax.f32 %v213, %v306
        %v313 = vmax.f32 %v214, %v307
        %v314 = vmax.f32 %v215, %v308
        %v315 = vmax.f32 %v216, %v309
        %v316 = vmax.f32 %v217, %v310
        %v317 = vlaneseq
        %v318 = vshrl.u32 %v317, 7
        %v319 = vadd.s32 %v318, 8
        %v320 = vadd.s32 %v318, 16
        %vm321 = vcmp.ge.s32.totalorder %v318, 1
        %vm322 = vcmp.ge.s32.totalorder %v319, 1
        %vm323 = vcmp.ge.s32.totalorder %v320, 1
        %vm324 = vcmp.le.s32.totalorder %v318, 16
        %vm325 = vcmp.le.s32.totalorder %v319, 16
        %vm326 = vcmp.le.s32.totalorder %v320, 16
        %vm327 = vmand %vm321, %vm324
        %vm328 = vmand %vm322, %vm325
        %vm329 = vmand %vm323, %vm326
        %v330 = vsel %vm327, 1, 0
        %v331 = vsel %vm328, 1, 0
        %v332 = vsel %vm329, 1, 0
        %vm333 = vcmp.eq.s32.totalorder %v330, 1
        %vm334 = vcmp.eq.s32.totalorder %v331, 1
        %vm335 = vcmp.eq.s32.totalorder %v332, 1
        %v336 = vsel %vm333, %v311, -inf
        %v337 = vsel %vm334, %v312, -inf
        %v338 = vsel %vm335, %v313, -inf
        %v339 = vsel %vm333, %v314, -inf
        %v340 = vsel %vm334, %v315, -inf
        %v341 = vsel %vm335, %v316, -inf
        %v348 = vrot.slane %v336, 1
        %v349 = vrot.slane %v337, 1
        %v350 = vsel %vm243, %v348, %v349
        %v351 = vrot.slane %v338, 1
        %v352 = vsel %vm243, %v349, %v351
        %v353 = vrot.slane %v339, 1
        %v354 = vrot.slane %v340, 1
        %v355 = vsel %vm243, %v353, %v354
        %v356 = vrot.slane %v341, 1
        %v357 = vsel %vm243, %v354, %v356
        %v364 = vmax.f32 %v336, %v350
        %v365 = vmax.f32 %v337, %v352
        %v366 = vmax.f32 %v338, %v351
        %v367 = vmax.f32 %v339, %v355
        %v368 = vmax.f32 %v340, %v357
        %v369 = vmax.f32 %v341, %v356
        %v376 = vrot.slane %v364, 1
        %v377 = vrot.slane %v365, 1
        %v378 = vsel %vm243, %v376, %v377
        %v379 = vrot.slane %v366, 1
        %v380 = vsel %vm243, %v377, %v379
        %v381 = vrot.slane %v367, 1
        %v382 = vrot.slane %v368, 1
        %v383 = vsel %vm243, %v381, %v382
        %v384 = vrot.slane %v369, 1
        %v385 = vsel %vm243, %v382, %v384
        %v390 = vmax.f32 %v336, %v378
        %v391 = vmax.f32 %v337, %v380
        %v392 = vmax.f32 %v339, %v383
        %v393 = vmax.f32 %v340, %v385
        %v400 = vrot.slane %v212, 1
        %v401 = vrot.slane %v213, 1
        %v402 = vsel %vm243, %v400, %v401
        %v403 = vrot.slane %v214, 1
        %v404 = vsel %vm243, %v401, %v403
        %v405 = vrot.slane %v215, 1
        %v406 = vrot.slane %v216, 1
        %v407 = vsel %vm243, %v405, %v406
        %v408 = vrot.slane %v217, 1
        %v409 = vsel %vm243, %v406, %v408
        %v414 = vrot.slane %v212, 2
        %v415 = vrot.slane %v213, 2
        %v416 = vsel %vm262, %v414, %v415
        %v417 = vrot.slane %v214, 2
        %v418 = vsel %vm262, %v415, %v417
        %v419 = vrot.slane %v215, 2
        %v420 = vrot.slane %v216, 2
        %v421 = vsel %vm262, %v419, %v420
        %v422 = vrot.slane %v217, 2
        %v423 = vsel %vm262, %v420, %v422
        %v428 = vpack.c.bf16 %v213, %v212
        %v429 = vpack.c.bf16 %v404, %v402
        %v430 = vpack.c.bf16 %v418, %v416
        %v431 = vpack.c.bf16 %v216, %v215
        %v432 = vpack.c.bf16 %v409, %v407
        %v433 = vpack.c.bf16 %v423, %v421
        %v434 = vld [vmem:[%s199] sm:$0xff]
        %v435 = vld [vmem:[%s199 + $0x8] sm:$0xff]
        %v436 = vld [vmem:[%s199 + $0x10] sm:$0xff]
        %v437 = vld [vmem:[%s199 + $0x18] sm:$0xff]
        %v438 = vld [vmem:[%s199 + $0x20] sm:$0xff]
        %v439 = vld [vmem:[%s199 + $0x28] sm:$0xff]
        %v440 = vld [vmem:[%s199 + $0x30] sm:$0xff]
        %v441 = vld [vmem:[%s199 + $0x38] sm:$0xff]
        %v442 = vld [vmem:[%s199 + $0x40] sm:$0xff]
        %v443 = vld [vmem:[%s199 + $0x48] sm:$0xff]
        %v444 = vld [vmem:[%s199 + $0x50] sm:$0xff]
        %v445 = vld [vmem:[%s199 + $0x58] sm:$0xff]
        %v446 = vld [vmem:[%s199 + $0x60] sm:$0xff]
        %v447 = vld [vmem:[%s199 + $0x68] sm:$0xff]
        %v448 = vld [vmem:[%s199 + $0x70] sm:$0xff]
        %v449 = vld [vmem:[%s199 + $0x78] sm:$0xff]
        %v450 = vld [vmem:[%s199 + $0x80] sm:$0xff]
        %v451 = vld [vmem:[%s199 + $0x88] sm:$0xff]
        %v452 = vld [vmem:[%s199 + $0x90] sm:$0xff]
        %v453 = vld [vmem:[%s199 + $0x98] sm:$0xff]
        %v454 = vld [vmem:[%s199 + $0xa0] sm:$0xff]
        %v455 = vld [vmem:[%s199 + $0xa8] sm:$0xff]
        %v456 = vld [vmem:[%s199 + $0xb0] sm:$0xff]
        %v457 = vld [vmem:[%s199 + $0xb8] sm:$0xff]
        %v458 = vld [vmem:[%s199 + $0xc0] sm:$0xff]
        %v459 = vld [vmem:[%s199 + $0xc8] sm:$0xff]
        %v460 = vld [vmem:[%s199 + $0xd0] sm:$0xff]
        %v461 = vld [vmem:[%s199 + $0xd8] sm:$0xff]
        %v462 = vld [vmem:[%s199 + $0xe0] sm:$0xff]
        %v463 = vld [vmem:[%s199 + $0xe8] sm:$0xff]
        %v464 = vld [vmem:[%s199 + $0xf0] sm:$0xff]
        %v465 = vld [vmem:[%s199 + $0xf8] sm:$0xff]
        %v466 = vld [vmem:[%s199 + $0x100] sm:$0xff]
        %v467 = vld [vmem:[%s199 + $0x108] sm:$0xff]
        %v468 = vld [vmem:[%s199 + $0x110] sm:$0xff]
        %v469 = vld [vmem:[%s199 + $0x118] sm:$0xff]
        %v470 = vld [vmem:[%s199 + $0x120] sm:$0xff]
        %v471 = vld [vmem:[%s199 + $0x128] sm:$0xff]
        %v472 = vld [vmem:[%s199 + $0x130] sm:$0xff]
        %v473 = vld [vmem:[%s199 + $0x138] sm:$0xff]
        %v474 = vld [vmem:[%s199 + $0x140] sm:$0xff]
        %v475 = vld [vmem:[%s199 + $0x148] sm:$0xff]
        %v476 = vld [vmem:[%s199 + $0x150] sm:$0xff]
        %v477 = vld [vmem:[%s199 + $0x158] sm:$0xff]
        %v478 = vld [vmem:[%s199 + $0x160] sm:$0xff]
        %v479 = vld [vmem:[%s199 + $0x168] sm:$0xff]
        %v480 = vld [vmem:[%s199 + $0x170] sm:$0xff]
        %v481 = vld [vmem:[%s199 + $0x178] sm:$0xff]
        %v530 = vunpack.c.l.b16 %v434
        %v531 = vunpack.c.h.b16 %v434
        %v532 = vunpack.c.l.b16 %v435
        %v533 = vunpack.c.h.b16 %v435
        %v534 = vunpack.c.l.b16 %v436
        %v535 = vunpack.c.h.b16 %v436
        %v536 = vunpack.c.l.b16 %v437
        %v537 = vunpack.c.h.b16 %v437
        %v538 = vunpack.c.l.b16 %v438
        %v539 = vunpack.c.h.b16 %v438
        %v540 = vunpack.c.l.b16 %v439
        %v541 = vunpack.c.h.b16 %v439
        %v542 = vunpack.c.l.b16 %v440
        %v543 = vunpack.c.h.b16 %v440
        %v544 = vunpack.c.l.b16 %v441
        %v545 = vunpack.c.h.b16 %v441
        %v546 = vunpack.c.l.b16 %v442
        %v547 = vunpack.c.h.b16 %v442
        %v548 = vunpack.c.l.b16 %v443
        %v549 = vunpack.c.h.b16 %v443
        %v550 = vunpack.c.l.b16 %v444
        %v551 = vunpack.c.h.b16 %v444
        %v552 = vunpack.c.l.b16 %v445
        %v553 = vunpack.c.h.b16 %v445
        %v554 = vunpack.c.l.b16 %v446
        %v555 = vunpack.c.h.b16 %v446
        %v556 = vunpack.c.l.b16 %v447
        %v557 = vunpack.c.h.b16 %v447
        %v558 = vunpack.c.l.b16 %v448
        %v559 = vunpack.c.h.b16 %v448
        %v560 = vunpack.c.l.b16 %v449
        %v561 = vunpack.c.h.b16 %v449
        %v562 = vunpack.c.l.b16 %v450
        %v563 = vunpack.c.h.b16 %v450
        %v564 = vunpack.c.l.b16 %v451
        %v565 = vunpack.c.h.b16 %v451
        %v566 = vunpack.c.l.b16 %v452
        %v567 = vunpack.c.h.b16 %v452
        %v568 = vunpack.c.l.b16 %v453
        %v569 = vunpack.c.h.b16 %v453
        %v570 = vunpack.c.l.b16 %v454
        %v571 = vunpack.c.h.b16 %v454
        %v572 = vunpack.c.l.b16 %v455
        %v573 = vunpack.c.h.b16 %v455
        %v574 = vunpack.c.l.b16 %v456
        %v575 = vunpack.c.h.b16 %v456
        %v576 = vunpack.c.l.b16 %v457
        %v577 = vunpack.c.h.b16 %v457
        %v578 = vunpack.c.l.b16 %v458
        %v579 = vunpack.c.h.b16 %v458
        %v580 = vunpack.c.l.b16 %v459
        %v581 = vunpack.c.h.b16 %v459
        %v582 = vunpack.c.l.b16 %v460
        %v583 = vunpack.c.h.b16 %v460
        %v584 = vunpack.c.l.b16 %v461
        %v585 = vunpack.c.h.b16 %v461
        %v586 = vunpack.c.l.b16 %v462
        %v587 = vunpack.c.h.b16 %v462
        %v588 = vunpack.c.l.b16 %v463
        %v589 = vunpack.c.h.b16 %v463
        %v590 = vunpack.c.l.b16 %v464
        %v591 = vunpack.c.h.b16 %v464
        %v592 = vunpack.c.l.b16 %v465
        %v593 = vunpack.c.h.b16 %v465
        %v594 = vunpack.c.l.b16 %v466
        %v595 = vunpack.c.h.b16 %v466
        %v596 = vunpack.c.l.b16 %v467
        %v597 = vunpack.c.h.b16 %v467
        %v598 = vunpack.c.l.b16 %v468
        %v599 = vunpack.c.h.b16 %v468
        %v600 = vunpack.c.l.b16 %v469
        %v601 = vunpack.c.h.b16 %v469
        %v602 = vunpack.c.l.b16 %v470
        %v603 = vunpack.c.h.b16 %v470
        %v604 = vunpack.c.l.b16 %v471
        %v605 = vunpack.c.h.b16 %v471
        %v606 = vunpack.c.l.b16 %v472
        %v607 = vunpack.c.h.b16 %v472
        %v608 = vunpack.c.l.b16 %v473
        %v609 = vunpack.c.h.b16 %v473
        %v610 = vunpack.c.l.b16 %v474
        %v611 = vunpack.c.h.b16 %v474
        %v612 = vunpack.c.l.b16 %v475
        %v613 = vunpack.c.h.b16 %v475
        %v614 = vunpack.c.l.b16 %v476
        %v615 = vunpack.c.h.b16 %v476
        %v616 = vunpack.c.l.b16 %v477
        %v617 = vunpack.c.h.b16 %v477
        %v618 = vunpack.c.l.b16 %v478
        %v619 = vunpack.c.h.b16 %v478
        %v620 = vunpack.c.l.b16 %v479
        %v621 = vunpack.c.h.b16 %v479
        %v622 = vunpack.c.l.b16 %v480
        %v623 = vunpack.c.h.b16 %v480
        %v624 = vunpack.c.l.b16 %v481
        %v625 = vunpack.c.h.b16 %v481
        %v626 = vpack.c.b16 %v532, %v530
        %v627 = vpack.c.b16 %v533, %v531
        %v628 = vpack.c.b16 %v536, %v534
        %v629 = vpack.c.b16 %v537, %v535
        %v630 = vpack.c.b16 %v540, %v538
        %v631 = vpack.c.b16 %v541, %v539
        %v632 = vpack.c.b16 %v544, %v542
        %v633 = vpack.c.b16 %v545, %v543
        %v634 = vpack.c.b16 %v548, %v546
        %v635 = vpack.c.b16 %v549, %v547
        %v636 = vpack.c.b16 %v552, %v550
        %v637 = vpack.c.b16 %v553, %v551
        %v638 = vpack.c.b16 %v556, %v554
        %v639 = vpack.c.b16 %v557, %v555
        %v640 = vpack.c.b16 %v560, %v558
        %v641 = vpack.c.b16 %v561, %v559
        %v642 = vpack.c.b16 %v564, %v562
        %v643 = vpack.c.b16 %v565, %v563
        %v644 = vpack.c.b16 %v568, %v566
        %v645 = vpack.c.b16 %v569, %v567
        %v646 = vpack.c.b16 %v572, %v570
        %v647 = vpack.c.b16 %v573, %v571
        %v648 = vpack.c.b16 %v576, %v574
        %v649 = vpack.c.b16 %v577, %v575
        %v650 = vpack.c.b16 %v580, %v578
        %v651 = vpack.c.b16 %v581, %v579
        %v652 = vpack.c.b16 %v584, %v582
        %v653 = vpack.c.b16 %v585, %v583
        %v654 = vpack.c.b16 %v588, %v586
        %v655 = vpack.c.b16 %v589, %v587
        %v656 = vpack.c.b16 %v592, %v590
        %v657 = vpack.c.b16 %v593, %v591
        %v658 = vpack.c.b16 %v596, %v594
        %v659 = vpack.c.b16 %v597, %v595
        %v660 = vpack.c.b16 %v600, %v598
        %v661 = vpack.c.b16 %v601, %v599
        %v662 = vpack.c.b16 %v604, %v602
        %v663 = vpack.c.b16 %v605, %v603
        %v664 = vpack.c.b16 %v608, %v606
        %v665 = vpack.c.b16 %v609, %v607
        %v666 = vpack.c.b16 %v612, %v610
        %v667 = vpack.c.b16 %v613, %v611
        %v668 = vpack.c.b16 %v616, %v614
        %v669 = vpack.c.b16 %v617, %v615
        %v670 = vpack.c.b16 %v620, %v618
        %v671 = vpack.c.b16 %v621, %v619
        %v672 = vpack.c.b16 %v624, %v622
        %v673 = vpack.c.b16 %v625, %v623
        %722 = vmatpush.bf16.msra.mxu0 %v640
        %723 = vmatpush.bf16.msra.mxu0 %v638
        %724 = vmatpush.bf16.msra.mxu0 %v636
        %725 = vmatpush.bf16.msra.mxu0 %v634
        %726 = vmatpush.bf16.msra.mxu0 %v632
        %727 = vmatpush.bf16.msra.mxu0 %v630
        %728 = vmatpush.bf16.msra.mxu0 %v628
        %729 = vmatpush.bf16.msra.mxu0 %v626
        %730 = vmatmul.bf16.gmra.mxu0 %v428
        %v731 = vpop.f32.mrf.mxu0
        %v732 = vadd.f32 0.0, %v731
        %v733 = vpop.f32.mrf.mxu0
        %v734 = vadd.f32 0.0, %v733
        %735 = vmatmul.bf16.gmra.mxu0 %v431
        %v736 = vpop.f32.mrf.mxu0
        %v737 = vadd.f32 0.0, %v736
        %v738 = vpop.f32.mrf.mxu0
        %v739 = vadd.f32 0.0, %v738
        %740 = vdwg.mxu0
        %741 = vmatpush.bf16.msra.mxu0 %v656
        %742 = vmatpush.bf16.msra.mxu0 %v654
        %743 = vmatpush.bf16.msra.mxu0 %v652
        %744 = vmatpush.bf16.msra.mxu0 %v650
        %745 = vmatpush.bf16.msra.mxu0 %v648
        %746 = vmatpush.bf16.msra.mxu0 %v646
        %747 = vmatpush.bf16.msra.mxu0 %v644
        %748 = vmatpush.bf16.msra.mxu0 %v642
        %749 = vmatmul.bf16.gmra.mxu0 %v429
        %v750 = vpop.f32.mrf.mxu0
        %v751 = vadd.f32 %v732, %v750
        %v752 = vpop.f32.mrf.mxu0
        %v753 = vadd.f32 %v734, %v752
        %754 = vmatmul.bf16.gmra.mxu0 %v432
        %v755 = vpop.f32.mrf.mxu0
        %v756 = vadd.f32 %v737, %v755
        %v757 = vpop.f32.mrf.mxu0
        %v758 = vadd.f32 %v739, %v757
        %759 = vdwg.mxu0
        %760 = vmatpush.bf16.msra.mxu0 %v672
        %761 = vmatpush.bf16.msra.mxu0 %v670
        %762 = vmatpush.bf16.msra.mxu0 %v668
        %763 = vmatpush.bf16.msra.mxu0 %v666
        %764 = vmatpush.bf16.msra.mxu0 %v664
        %765 = vmatpush.bf16.msra.mxu0 %v662
        %766 = vmatpush.bf16.msra.mxu0 %v660
        %767 = vmatpush.bf16.msra.mxu0 %v658
        %768 = vmatmul.bf16.gmra.mxu0 %v430
        %v769 = vpop.f32.mrf.mxu0
        %v770 = vadd.f32 %v751, %v769
        %v771 = vpop.f32.mrf.mxu0
        %v772 = vadd.f32 %v753, %v771
        %773 = vmatmul.bf16.gmra.mxu0 %v433
        %v774 = vpop.f32.mrf.mxu0
        %v775 = vadd.f32 %v756, %v774
        %v776 = vpop.f32.mrf.mxu0
        %v777 = vadd.f32 %v758, %v776
        %778 = vdwg.mxu0
        %779 = vmatpush.bf16.msra.mxu0 %v641
        %780 = vmatpush.bf16.msra.mxu0 %v639
        %781 = vmatpush.bf16.msra.mxu0 %v637
        %782 = vmatpush.bf16.msra.mxu0 %v635
        %783 = vmatpush.bf16.msra.mxu0 %v633
        %784 = vmatpush.bf16.msra.mxu0 %v631
        %785 = vmatpush.bf16.msra.mxu0 %v629
        %786 = vmatpush.bf16.msra.mxu0 %v627
        %787 = vmatmul.bf16.gmra.mxu0 %v428
        %v788 = vpop.f32.mrf.mxu0
        %v789 = vadd.f32 0.0, %v788
        %v790 = vpop.f32.mrf.mxu0
        %v791 = vadd.f32 0.0, %v790
        %792 = vmatmul.bf16.gmra.mxu0 %v431
        %v793 = vpop.f32.mrf.mxu0
        %v794 = vadd.f32 0.0, %v793
        %v795 = vpop.f32.mrf.mxu0
        %v796 = vadd.f32 0.0, %v795
        %797 = vdwg.mxu0
        %798 = vmatpush.bf16.msra.mxu0 %v657
        %799 = vmatpush.bf16.msra.mxu0 %v655
        %800 = vmatpush.bf16.msra.mxu0 %v653
        %801 = vmatpush.bf16.msra.mxu0 %v651
        %802 = vmatpush.bf16.msra.mxu0 %v649
        %803 = vmatpush.bf16.msra.mxu0 %v647
        %804 = vmatpush.bf16.msra.mxu0 %v645
        %805 = vmatpush.bf16.msra.mxu0 %v643
        %806 = vmatmul.bf16.gmra.mxu0 %v429
        %v807 = vpop.f32.mrf.mxu0
        %v808 = vadd.f32 %v789, %v807
        %v809 = vpop.f32.mrf.mxu0
        %v810 = vadd.f32 %v791, %v809
        %811 = vmatmul.bf16.gmra.mxu0 %v432
        %v812 = vpop.f32.mrf.mxu0
        %v813 = vadd.f32 %v794, %v812
        %v814 = vpop.f32.mrf.mxu0
        %v815 = vadd.f32 %v796, %v814
        %816 = vdwg.mxu0
        %817 = vmatpush.bf16.msra.mxu0 %v673
        %818 = vmatpush.bf16.msra.mxu0 %v671
        %819 = vmatpush.bf16.msra.mxu0 %v669
        %820 = vmatpush.bf16.msra.mxu0 %v667
        %821 = vmatpush.bf16.msra.mxu0 %v665
        %822 = vmatpush.bf16.msra.mxu0 %v663
        %823 = vmatpush.bf16.msra.mxu0 %v661
        %824 = vmatpush.bf16.msra.mxu0 %v659
        %825 = vmatmul.bf16.gmra.mxu0 %v430
        %v826 = vpop.f32.mrf.mxu0
        %v827 = vadd.f32 %v808, %v826
        %v828 = vpop.f32.mrf.mxu0
        %v829 = vadd.f32 %v810, %v828
        %830 = vmatmul.bf16.gmra.mxu0 %v433
        %v831 = vpop.f32.mrf.mxu0
        %v832 = vadd.f32 %v813, %v831
        %v833 = vpop.f32.mrf.mxu0
        %v834 = vadd.f32 %v815, %v833
        %835 = vdwg.mxu0
        %v836 = vadd.f32 %v770, %v772
        %v837 = vadd.f32 %v836, %v775
        %v838 = vadd.f32 %v837, %v777
        %v839 = vrot.slane %v838, 4
        %v840 = vadd.f32 %v838, %v839
        %v841 = vrot.slane %v840, 2
        %v842 = vadd.f32 %v840, %v841
        %v843 = vrot.slane %v842, 1
        %v844 = vadd.f32 %v842, %v843
        %v845 = vadd.f32 %v827, %v829
        %v846 = vadd.f32 %v845, %v832
        %v847 = vadd.f32 %v846, %v834
        %v848 = vrot.slane %v847, 4
        %v849 = vadd.f32 %v847, %v848
        %v850 = vrot.slane %v849, 2
        %v851 = vadd.f32 %v849, %v850
        %v852 = vrot.slane %v851, 1
        %v853 = vadd.f32 %v851, %v852
        %v854 = vmul.f32 %v770, %v770
        %v855 = vmul.f32 %v827, %v827
        %v856 = vmul.f32 %v772, %v772
        %v857 = vmul.f32 %v829, %v829
        %v858 = vmul.f32 %v775, %v775
        %v859 = vmul.f32 %v832, %v832
        %v860 = vmul.f32 %v777, %v777
        %v861 = vmul.f32 %v834, %v834
        %v862 = vadd.f32 %v854, %v856
        %v863 = vadd.f32 %v862, %v858
        %v864 = vadd.f32 %v863, %v860
        %v865 = vrot.slane %v864, 4
        %v866 = vadd.f32 %v864, %v865
        %v867 = vrot.slane %v866, 2
        %v868 = vadd.f32 %v866, %v867
        %v869 = vrot.slane %v868, 1
        %v870 = vadd.f32 %v868, %v869
        %v871 = vadd.f32 %v855, %v857
        %v872 = vadd.f32 %v871, %v859
        %v873 = vadd.f32 %v872, %v861
        %v874 = vrot.slane %v873, 4
        %v875 = vadd.f32 %v873, %v874
        %v876 = vrot.slane %v875, 2
        %v877 = vadd.f32 %v875, %v876
        %v878 = vrot.slane %v877, 1
        %v879 = vadd.f32 %v877, %v878
        %880 = vrot.lane.b32.xlu0 %v844, 64
        %v881 = vpop.permute.xlu0 %880
        %v882 = vadd.f32 %v844, %v881
        %883 = vrot.lane.b32.xlu0 %v882, 32
        %v884 = vpop.permute.xlu0 %883
        %v885 = vadd.f32 %v882, %v884
        %886 = vrot.lane.b32.xlu0 %v885, 16
        %v887 = vpop.permute.xlu0 %886
        %v888 = vadd.f32 %v885, %v887
        %889 = vrot.lane.b32.xlu0 %v888, 8
        %v890 = vpop.permute.xlu0 %889
        %v891 = vadd.f32 %v888, %v890
        %v892 = vmul.f32 %v891, 0.001953125
        %893 = vrot.lane.b32.xlu0 %v870, 64
        %v894 = vpop.permute.xlu0 %893
        %v895 = vadd.f32 %v870, %v894
        %896 = vrot.lane.b32.xlu0 %v895, 32
        %v897 = vpop.permute.xlu0 %896
        %v898 = vadd.f32 %v895, %v897
        %899 = vrot.lane.b32.xlu0 %v898, 16
        %v900 = vpop.permute.xlu0 %899
        %v901 = vadd.f32 %v898, %v900
        %902 = vrot.lane.b32.xlu0 %v901, 8
        %v903 = vpop.permute.xlu0 %902
        %v904 = vadd.f32 %v901, %v903
        %v905 = vmul.f32 %v904, 0.001953125
        %v906 = vmul.f32 %v892, %v892
        %v907 = vsub.f32 %v905, %v906
        %v908 = vperm.slane %v892, 0
        %v909 = vsub.f32 %v770, %v908
        %v910 = vsub.f32 %v772, %v908
        %v911 = vsub.f32 %v775, %v908
        %v912 = vsub.f32 %v777, %v908
        %v913 = vadd.f32 %v907, 1e-05
        %v914 = vrsqrt.pop %v913
        %v915 = vmul.f32 %v914, %v913
        %v916 = vmul.f32 %v915, %v914
        %v917 = vmul.f32 0.5, %v916
        %v918 = vsub.f32 1.5, %v917
        %v919 = vmul.f32 %v914, %v918
        %vm920 = vweird.f32 %v913
        %vm921 = vweird.f32 %v914
        %vm922 = vmor %vm920, %vm921
        %v923 = vsel %vm922, %v914, %v919
        %v924 = vperm.slane %v923, 0
        %v925 = vmul.f32 %v909, %v924
        %v926 = vmul.f32 %v910, %v924
        %v927 = vmul.f32 %v911, %v924
        %v928 = vmul.f32 %v912, %v924
        %v929 = vmax.f32 %v925, 0.0
        %v930 = vmax.f32 %v926, 0.0
        %v931 = vmax.f32 %v927, 0.0
        %v932 = vmax.f32 %v928, 0.0
        %933 = vrot.lane.b32.xlu0 %v853, 64
        %v934 = vpop.permute.xlu0 %933
        %v935 = vadd.f32 %v853, %v934
        %936 = vrot.lane.b32.xlu0 %v935, 32
        %v937 = vpop.permute.xlu0 %936
        %v938 = vadd.f32 %v935, %v937
        %939 = vrot.lane.b32.xlu0 %v938, 16
        %v940 = vpop.permute.xlu0 %939
        %v941 = vadd.f32 %v938, %v940
        %942 = vrot.lane.b32.xlu0 %v941, 8
        %v943 = vpop.permute.xlu0 %942
        %v944 = vadd.f32 %v941, %v943
        %v945 = vmul.f32 %v944, 0.001953125
        %946 = vrot.lane.b32.xlu0 %v879, 64
        %v947 = vpop.permute.xlu0 %946
        %v948 = vadd.f32 %v879, %v947
        %949 = vrot.lane.b32.xlu0 %v948, 32
        %v950 = vpop.permute.xlu0 %949
        %v951 = vadd.f32 %v948, %v950
        %952 = vrot.lane.b32.xlu0 %v951, 16
        %v953 = vpop.permute.xlu0 %952
        %v954 = vadd.f32 %v951, %v953
        %955 = vrot.lane.b32.xlu0 %v954, 8
        %v956 = vpop.permute.xlu0 %955
        %v957 = vadd.f32 %v954, %v956
        %v958 = vmul.f32 %v957, 0.001953125
        %v959 = vmul.f32 %v945, %v945
        %v960 = vsub.f32 %v958, %v959
        %v961 = vperm.slane %v945, 0
        %v962 = vsub.f32 %v827, %v961
        %v963 = vsub.f32 %v829, %v961
        %v964 = vsub.f32 %v832, %v961
        %v965 = vsub.f32 %v834, %v961
        %v966 = vadd.f32 %v960, 1e-05
        %v967 = vrsqrt.pop %v966
        %v968 = vmul.f32 %v967, %v966
        %v969 = vmul.f32 %v968, %v967
        %v970 = vmul.f32 0.5, %v969
        %v971 = vsub.f32 1.5, %v970
        %v972 = vmul.f32 %v967, %v971
        %vm973 = vweird.f32 %v966
        %vm974 = vweird.f32 %v967
        %vm975 = vmor %vm973, %vm974
        %v976 = vsel %vm975, %v967, %v972
        %v977 = vperm.slane %v976, 0
        %v978 = vmul.f32 %v962, %v977
        %v979 = vmul.f32 %v963, %v977
        %v980 = vmul.f32 %v964, %v977
        %v981 = vmul.f32 %v965, %v977
        %v982 = vmax.f32 %v978, 0.0
        %v983 = vmax.f32 %v979, 0.0
        %v984 = vmax.f32 %v980, 0.0
        %v985 = vmax.f32 %v981, 0.0
        %s986 = smul.u32 %s15, 128
        %s987 = sld [smem:[#allocation2 + %s986]]
        %v988 = vstv %s987
        %v989 = vmul.f32 %v988, %v390
        %v990 = vmul.f32 %v988, %v391
        %v991 = vmul.f32 %v988, %v392
        %v992 = vmul.f32 %v988, %v393
        %s993 = sadd.s32 %s986, 1
        %s994 = sld [smem:[#allocation2 + %s993]]
        %v995 = vstv %s994
        %v996 = vmul.f32 %v995, %v281
        %v997 = vmul.f32 %v995, %v282
        %v998 = vmul.f32 %v995, %v283
        %v999 = vmul.f32 %v995, %v284
        %v1000 = vadd.f32 %v989, %v996
        %v1001 = vadd.f32 %v990, %v997
        %v1002 = vadd.f32 %v991, %v998
        %v1003 = vadd.f32 %v992, %v999
        %s1004 = sadd.s32 %s986, 2
        %s1005 = sld [smem:[#allocation2 + %s1004]]
        %v1006 = vstv %s1005
        %v1007 = vmul.f32 %v1006, %v929
        %v1008 = vmul.f32 %v1006, %v930
        %v1009 = vmul.f32 %v1006, %v931
        %v1010 = vmul.f32 %v1006, %v932
        %v1011 = vadd.f32 %v1000, %v1007
        %v1012 = vadd.f32 %v1001, %v1008
        %v1013 = vadd.f32 %v1002, %v1009
        %v1014 = vadd.f32 %v1003, %v1010
        %s1015 = sadd.s32 %s986, 3
        %s1016 = sld [smem:[#allocation2 + %s1015]]
        %v1017 = vstv %s1016
        %v1018 = vmul.f32 %v1017, %v982
        %v1019 = vmul.f32 %v1017, %v983
        %v1020 = vmul.f32 %v1017, %v984
        %v1021 = vmul.f32 %v1017, %v985
        %v1022 = vadd.f32 %v1011, %v1018
        %v1023 = vadd.f32 %v1012, %v1019
        %v1024 = vadd.f32 %v1013, %v1020
        %v1025 = vadd.f32 %v1014, %v1021
        %s1026 = sadd.s32 %s986, 4
        %s1027 = sld [smem:[#allocation2 + %s1026]]
        %v1028 = vstv %s1027
        %v1029 = vmul.f32 %v1028, %v212
        %v1030 = vmul.f32 %v1028, %v213
        %v1031 = vmul.f32 %v1028, %v214
        %v1032 = vmul.f32 %v1028, %v215
        %v1033 = vmul.f32 %v1028, %v216
        %v1034 = vmul.f32 %v1028, %v217
        %v1041 = vrot.slane %v1029, 1
        %v1042 = vrot.slane %v1030, 1
        %v1043 = vsel %vm243, %v1041, %v1042
        %v1044 = vrot.slane %v1031, 1
        %v1045 = vsel %vm243, %v1042, %v1044
        %v1046 = vrot.slane %v1032, 1
        %v1047 = vrot.slane %v1033, 1
        %v1048 = vsel %vm243, %v1046, %v1047
        %v1049 = vrot.slane %v1034, 1
        %v1050 = vsel %vm243, %v1047, %v1049
        %v1055 = vadd.f32 %v1022, %v1043
        %v1056 = vadd.f32 %v1023, %v1045
        %v1057 = vadd.f32 %v1024, %v1048
        %v1058 = vadd.f32 %v1025, %v1050
        %1059 = vst [vmem:[%s204] sm:$0xff] %v1055
        %1060 = vst [vmem:[%s204 + $0x8] sm:$0xff] %v1056
        %1061 = vst [vmem:[%s204 + $0x10] sm:$0xff] %v1057
        %1062 = vst [vmem:[%s204 + $0x18] sm:$0xff] %v1058
        %p1063 = scmp.lt.s32.totalorder %s15, 3
        %s1064 = scalar_select %p1063, %s15, 3
        %s1065 = smul.addr %s1064, 4
        %s1066 = smul.addr %s1065, 8
        %s1067 = scalar_lea.vmem %s3, %s1066
        // Predicated region
        $region37: #{mixed_operation_forward.1} parent=31 // pred_check
          %p1068 = pneg %p106
        $region38: #{mixed_operation_forward.1} parent=31 // pred_check_branch
          %1070 = sbr.rel (%p1068) target = $region40
        $region39: #{mixed_operation_forward.1} parent=31 // pred_region
          _
        $region40: #{mixed_operation_forward.1} parent=31 // pred_fallthru
          _
      $region32: #{mixed_operation_forward.1} parent=5 // pred_fallthru
        _
      %p1071 = scmp.le.s32.totalorder 2, %s10
      // Predicated region
      $region41: #{mixed_operation_forward.1} parent=5 // pred_check
        %p1072 = pneg %p1071
      $region42: #{mixed_operation_forward.1} parent=5 // pred_check_branch
        %1074 = sbr.rel (%p1072) target = $region44
      $region43: #{mixed_operation_forward.1} parent=5 // pred_region
        %s1075 = ssub.s32 %s10, 2
        // Predicated region
        $region45: #{mixed_operation_forward.1} parent=43 // pred_check
          %p1076 = pneg %p112
        $region46: #{mixed_operation_forward.1} parent=43 // pred_check_branch
          %1078 = sbr.rel (%p1076) target = $region48
        $region47: #{mixed_operation_forward.1} parent=43 // pred_region
          %p1079 = scmp.lt.s32.totalorder %s16, 3
          %s1080 = scalar_select %p1079, %s16, 3
          %s1081 = smul.addr %s1080, 4
          %s1082 = smul.addr %s1081, 8
          %s1083 = scalar_lea.vmem %s3, %s1082
        $region48: #{mixed_operation_forward.1} parent=43 // pred_fallthru
          _
      $region44: #{mixed_operation_forward.1} parent=5 // pred_fallthru
        _
    $region6: #{mixed_operation_forward.1} parent=1 // loop_footer
      %s14 = sadd.s32 1, %s10
    $region7: #{mixed_operation_forward.1} parent=1 // loop_footer_branch
      %9 = sbr.rel target = $region3
    $region8: #{mixed_operation_forward.1} parent=1 // loop_exit
      _
    %1084 = vsyncpa [#allocation3], 1
    %s1085 = scalar_lea.sflag [#allocation3], 1
    %1086 = vsyncpa %s1085, 1

</llo_original>
